<compile_context>
chip_gen: v5e
topology: v5e:2x2
jax: 0.10.0
libtpu: 0.0.40
codegen_flags: <defaults>
</compile_context>

<pallas_src>
import functools

import jax
import jax.numpy as jnp
from jax.experimental import pallas as pl
from jax.experimental.pallas import tpu as pltpu


def _relu(x):
    # TODO(synk): act_func is a constructor argument in the PyTorch module; ReLU is used here.
    return jnp.maximum(x, 0.0)


def _meann_kernel(act, attr_ref, adj_ref, wt_ref, b_ref, out_ref):
    """One batch tile: attr (bt,N,D), adj (bt,N,N), wt (2D,O), b (1,O), out (bt,N,O)."""
    bt, n, d = attr_ref.shape
    o = out_ref.shape[-1]

    attr = attr_ref[...]                                    # (bt, N, D), native dtype
    adj = adj_ref[...]                                      # (bt, N, N), native dtype

    # --- Mean_Agg: batched neighborhood aggregation on the MXU, f32 accumulation ---
    agg = jnp.einsum("bij,bjd->bid", adj, attr,
                     preferred_element_type=jnp.float32)    # (bt, N, D) f32

    # --- torch.count_nonzero(adj, dim=1): in-degree counts, ONCE per tile.
    #     VPU compare + sublane reduce (off the MXU, overlaps the matmul above);
    #     count arithmetic stays in f32 (v5e has no bf16 VPU path). ---
    cnt = jnp.sum((adj != 0.0).astype(jnp.float32), axis=1)          # (bt, N)
    inv = pl.reciprocal(cnt + 1.0, approx=True)                      # EUP slot
    agg = agg * inv[:, :, None]                                      # one lane->sublane relayout
    # TODO(synk): F.dropout is identity in eval mode; training-mode dropout not implemented.

    # --- EdgeEmbedding_F3_4: Linear(cat([attr, agg], -1)) as ONE flattened MXU pass ---
    x = jnp.concatenate([attr, agg.astype(attr.dtype)], axis=-1)     # (bt, N, 2D)
    x2d = x.reshape(bt * n, 2 * d)                                    # (bt*N, 2D)
    emb = jnp.dot(x2d, wt_ref[...], preferred_element_type=jnp.float32)   # (bt*N, O)
    emb = act(emb + b_ref[...].astype(jnp.float32))                   # bias broadcast once
    out_ref[...] = emb.reshape(bt, n, o).astype(out_ref.dtype)


def _vmem_capacity_bytes():
    """Queried per-core VMEM capacity; conservative fallback (v7x per-TC) if unavailable."""
    try:
        return int(pltpu.get_tpu_info().vmem_capacity_bytes)
    except Exception:
        return 64 * 1024 * 1024


def _num_tensorcores():
    """Best-effort TensorCore count for grid-step parity; defaults to 1 (safe either way)."""
    try:
        dev = jax.devices()[0]
        for attr in ("num_cores", "num_tensorcores"):
            val = getattr(dev, attr, None)
            if isinstance(val, int) and val > 0:
                return val
        info = pltpu.get_tpu_info()
        for attr in ("tensorcore_count", "num_cores"):
            val = getattr(info, attr, None)
            if isinstance(val, int) and val > 0:
                return val
    except Exception:
        pass
    return 1


def _pick_batch_tile(B, N, D, O, itemsize, budget_bytes, num_cores):
    """Largest batch tile whose real VMEM footprint (double-buffered I/O blocks, resident
    weights, f32 intermediates) fits the budget; 2-TC chips prefer an even grid-step count."""
    def step_bytes(bt):
        io = 2 * bt * itemsize * (N * D + N * N + N * O)     # double-buffered in/out blocks
        resident = 2 * itemsize * (2 * D * O + O)            # weight^T + bias blocks
        interm = 4 * bt * N * (D + 2 * D + O)                # f32 agg / concat / emb values
        return io + resident + interm

    fits = [bt for bt in range(1, B + 1) if B % bt == 0 and step_bytes(bt) <= budget_bytes]
    if not fits:
        return 1
    if num_cores > 1 and B > 1:
        even = [bt for bt in fits if (B // bt) % 2 == 0]
        if even:
            return max(even)
    return max(fits)


def meann_forward(attr, adj, weight, bias, p_max=0, mask=None, act=None):
    """Pallas MeanN forward (eval mode). `p_max` / `mask` are accepted for signature parity
    with the PyTorch module but unused (as in the reference math). `weight` is the torch
    Linear weight of shape (output_channels, 2*input_channels)."""
    del p_max, mask
    B, N, D = attr.shape
    O, two_d = weight.shape
    assert adj.shape == (B, N, N) and two_d == 2 * D and bias.shape[-1] == O
    act = act if act is not None else _relu

    wt = weight.T                      # (2D, O): lane-dense output, no in-kernel transpose
    bias2d = bias.reshape(1, O)

    vmem_cap = _vmem_capacity_bytes()
    vmem_limit = min(64 * 1024 * 1024, max(32 * 1024 * 1024, (3 * vmem_cap) // 4))
    budget = (3 * vmem_limit) // 4
    bt = _pick_batch_tile(B, N, D, O, jnp.dtype(attr.dtype).itemsize,
                          budget, _num_tensorcores())

    # TODO(synk): for very large N the (bt, N, N) adj block outgrows VMEM (worst on v7x's
    # 64 MiB); add a row tile over N plus an "arbitrary" K axis over adj columns with an
    # f32 VMEM accumulator carrying both the partial matmul and the partial nonzero counts.
    kernel = functools.partial(_meann_kernel, act)
    return pl.pallas_call(
        kernel,
        out_shape=jax.ShapeDtypeStruct((B, N, O), attr.dtype),
        grid_spec=pltpu.PrefetchScalarGridSpec(
            num_scalar_prefetch=0,
            grid=(B // bt,),
            in_specs=[
                pl.BlockSpec((bt, N, D), lambda i: (i, 0, 0)),   # attr
                pl.BlockSpec((bt, N, N), lambda i: (i, 0, 0)),   # adj
                pl.BlockSpec((2 * D, O), lambda i: (0, 0)),      # W^T (resident)
                pl.BlockSpec((1, O), lambda i: (0, 0)),          # bias (resident)
            ],
            out_specs=pl.BlockSpec((bt, N, O), lambda i: (i, 0, 0)),
        ),
        compiler_params=pltpu.CompilerParams(
            dimension_semantics=("parallel",),
            vmem_limit_bytes=vmem_limit,
        ),
    )(attr, adj, wt, bias2d)


def meann_ref(attr, adj, weight, bias, act=None):
    """Plain-JAX reference mirroring MeanN.forward (eval mode), computed in f32."""
    act = act if act is not None else _relu
    attr32 = attr.astype(jnp.float32)
    adj32 = adj.astype(jnp.float32)
    agg = jnp.einsum("bij,bjd->bid", adj32, attr32)
    cnt = jnp.sum((adj32 != 0.0).astype(jnp.float32), axis=1)   # count_nonzero(dim=1)
    agg = agg / (cnt[:, :, None] + 1.0)
    x = jnp.concatenate([attr32, agg], axis=-1)                 # (B, N, 2D)
    emb = jnp.einsum("bnk,ok->bno", x, weight.astype(jnp.float32))
    emb = emb + bias.astype(jnp.float32).reshape(1, 1, -1)
    return act(emb)


if __name__ == "__main__":
    key = jax.random.PRNGKey(0)
    k_attr, k_adj, k_w, k_b = jax.random.split(key, 4)

    # batch, nodes, input_channels, output_channels (O chosen lane-dense: multiple of 128)
    B, N, D, O = 2, 16, 32, 128
    attr = jax.random.normal(k_attr, (B, N, D), dtype=jnp.float32)
    adj = (jax.random.uniform(k_adj, (B, N, N)) < 0.4).astype(jnp.float32)  # 0/1 adjacency
    lim = 1.0 / (2 * D) ** 0.5                                  # torch Linear default init
    weight = jax.random.uniform(k_w, (O, 2 * D), jnp.float32, -lim, lim)
    bias = jax.random.uniform(k_b, (O,), jnp.float32, -lim, lim)

    # f32 run (tolerance loosened slightly for the approximate EUP reciprocal).
    out = jax.block_until_ready(meann_forward(attr, adj, weight, bias))
    expected = meann_ref(attr, adj, weight, bias)
    assert out.shape == (B, N, O)
    assert jnp.allclose(out, expected, rtol=2e-2, atol=2e-2), "f32 mismatch vs reference"

    # bf16 run: inputs feed the MXU directly (no forced f32 upcast inside the kernel).
    attr_bf = attr.astype(jnp.bfloat16)
    adj_bf = adj.astype(jnp.bfloat16)
    w_bf = weight.astype(jnp.bfloat16)
    b_bf = bias.astype(jnp.bfloat16)
    out_bf = jax.block_until_ready(meann_forward(attr_bf, adj_bf, w_bf, b_bf))
    expected_bf = meann_ref(attr_bf, adj_bf, w_bf, b_bf)
    assert out_bf.dtype == jnp.bfloat16 and out_bf.shape == (B, N, O)
    assert jnp.allclose(out_bf.astype(jnp.float32), expected_bf, rtol=1e-1, atol=1.5e-1), \
        "bf16 mismatch vs reference"

    print("KERNEL_OK")
</pallas_src>

<mosaic_0001>
module attributes {stable_mosaic.version = 11 : i64} {
  func.func @_meann_kernel(%arg0: i32, %arg1: memref<2x16x32xf32, #tpu.memory_space<vmem>>, %arg2: memref<2x16x16xf32, #tpu.memory_space<vmem>>, %arg3: memref<64x128xf32, #tpu.memory_space<vmem>>, %arg4: memref<1x128xf32, #tpu.memory_space<vmem>>, %arg5: memref<2x16x128xf32, #tpu.memory_space<vmem>>) attributes {dimension_semantics = [#tpu.dimension_semantics<parallel>], iteration_bounds = array<i64: 1>, scalar_prefetch = 0 : i64, scratch_operands = 0 : i64, tpu.core_type = #tpu.core_type<tc>, window_params = [{transform_indices = @transform_0, window_bounds = array<i64: 2, 16, 32>}, {transform_indices = @transform_1, window_bounds = array<i64: 2, 16, 16>}, {pipeline_mode = #tpu.pipeline_mode<synchronous>, transform_indices = @transform_2, window_bounds = array<i64: 64, 128>}, {pipeline_mode = #tpu.pipeline_mode<synchronous>, transform_indices = @transform_3, window_bounds = array<i64: 1, 128>}, {transform_indices = @transform_4, window_bounds = array<i64: 2, 16, 128>}]} {
    %c0 = arith.constant 0 : index
    %c0_0 = arith.constant 0 : index
    %c0_1 = arith.constant 0 : index
    %0 = vector.load %arg1[%c0, %c0_0, %c0_1] : memref<2x16x32xf32, #tpu.memory_space<vmem>>, vector<2x16x32xf32>
    %c0_2 = arith.constant 0 : index
    %c0_3 = arith.constant 0 : index
    %c0_4 = arith.constant 0 : index
    %1 = vector.load %arg2[%c0_2, %c0_3, %c0_4] : memref<2x16x16xf32, #tpu.memory_space<vmem>>, vector<2x16x16xf32>
    "tpu.trace_start"() <{level = 10 : i32, message = "bij,bjd->bid"}> : () -> ()
    %cst = arith.constant dense<0.000000e+00> : vector<2x16x32xf32>
    %2 = tpu.matmul %1, %0, %cst {dimension_numbers = #tpu.dot_dimension_numbers<[2], [1], [1], [2], [0, 0, 0, 1, 1, 2], [0], [0]>} : vector<2x16x16xf32>, vector<2x16x32xf32>, vector<2x16x32xf32> -> vector<2x16x32xf32>
    %cst_5 = arith.constant 0.000000e+00 : f32
    "tpu.trace_stop"() : () -> ()
    %3 = vector.broadcast %cst_5 : f32 to vector<2x16x16xf32>
    %4 = arith.cmpf one, %1, %3 : vector<2x16x16xf32>
    %5 = arith.extui %4 : vector<2x16x16xi1> to vector<2x16x16xi32>
    %6 = arith.sitofp %5 : vector<2x16x16xi32> to vector<2x16x16xf32>
    %cst_6 = arith.constant dense<0.000000e+00> : vector<2x16xf32>
    %7 = vector.multi_reduction <add>, %6, %cst_6 [1] : vector<2x16x16xf32> to vector<2x16xf32>
    %cst_7 = arith.constant 1.000000e+00 : f32
    %8 = vector.broadcast %cst_7 : f32 to vector<2x16xf32>
    %9 = arith.addf %7, %8 : vector<2x16xf32>
    %10 = tpu.reciprocal %9 {approx = true} : vector<2x16xf32> -> vector<2x16xf32>
    %11 = vector.shape_cast %10 : vector<2x16xf32> to vector<2x16x1xf32>
    %12 = vector.broadcast %11 : vector<2x16x1xf32> to vector<2x16x32xf32>
    %13 = arith.mulf %2, %12 : vector<2x16x32xf32>
    %14 = tpu.concatenate %0, %13 in 2 : vector<2x16x32xf32>, vector<2x16x32xf32> -> vector<2x16x64xf32>
    %15 = vector.shape_cast %14 : vector<2x16x64xf32> to vector<32x64xf32>
    %c0_8 = arith.constant 0 : index
    %c0_9 = arith.constant 0 : index
    %16 = vector.load %arg3[%c0_8, %c0_9] : memref<64x128xf32, #tpu.memory_space<vmem>>, vector<64x128xf32>
    %cst_10 = arith.constant dense<0.000000e+00> : vector<32x128xf32>
    %17 = tpu.matmul %15, %16, %cst_10 {dimension_numbers = #tpu.dot_dimension_numbers<[1], [0], [0], [1], [0, 0, 1, 1], [], []>} : vector<32x64xf32>, vector<64x128xf32>, vector<32x128xf32> -> vector<32x128xf32>
    %c0_11 = arith.constant 0 : index
    %c0_12 = arith.constant 0 : index
    %18 = vector.load %arg4[%c0_11, %c0_12] : memref<1x128xf32, #tpu.memory_space<vmem>>, vector<1x128xf32>
    %19 = vector.broadcast %18 : vector<1x128xf32> to vector<32x128xf32>
    %20 = arith.addf %17, %19 : vector<32x128xf32>
    %cst_13 = arith.constant 0.000000e+00 : f32
    %21 = vector.broadcast %cst_13 : f32 to vector<32x128xf32>
    %22 = arith.maximumf %20, %21 : vector<32x128xf32>
    %23 = vector.shape_cast %22 : vector<32x128xf32> to vector<2x16x128xf32>
    %c0_14 = arith.constant 0 : index
    %c0_15 = arith.constant 0 : index
    %c0_16 = arith.constant 0 : index
    %24 = vector.load %arg5[%c0_14, %c0_15, %c0_16] : memref<2x16x128xf32, #tpu.memory_space<vmem>>, vector<2x16x128xf32>
    tpu.vector_store %arg5[%c0_14, %c0_15, %c0_16], %23 {strides = array<i32>} : memref<2x16x128xf32, #tpu.memory_space<vmem>>, vector<2x16x128xf32>,
    return
  }
  func.func @transform_0(%arg0: i32) -> (i32, i32, i32) {
    %c0_i32 = arith.constant 0 : i32
    %c0_i32_0 = arith.constant 0 : i32
    %c0_i32_1 = arith.constant 0 : i32
    return %arg0, %c0_i32, %c0_i32_0 : i32, i32, i32
  }
  func.func @transform_1(%arg0: i32) -> (i32, i32, i32) {
    %c0_i32 = arith.constant 0 : i32
    %c0_i32_0 = arith.constant 0 : i32
    %c0_i32_1 = arith.constant 0 : i32
    return %arg0, %c0_i32, %c0_i32_0 : i32, i32, i32
  }
  func.func @transform_2(%arg0: i32) -> (i32, i32) {
    %c0_i32 = arith.constant 0 : i32
    %c0_i32_0 = arith.constant 0 : i32
    %c0_i32_1 = arith.constant 0 : i32
    return %c0_i32, %c0_i32_0 : i32, i32
  }
  func.func @transform_3(%arg0: i32) -> (i32, i32) {
    %c0_i32 = arith.constant 0 : i32
    %c0_i32_0 = arith.constant 0 : i32
    %c0_i32_1 = arith.constant 0 : i32
    return %c0_i32, %c0_i32_0 : i32, i32
  }
  func.func @transform_4(%arg0: i32) -> (i32, i32, i32) {
    %c0_i32 = arith.constant 0 : i32
    %c0_i32_0 = arith.constant 0 : i32
    %c0_i32_1 = arith.constant 0 : i32
    return %arg0, %c0_i32, %c0_i32_0 : i32, i32, i32
  }
}

</mosaic_0001>

<llo_original>
// kernel: tpu_custom_call.1
$region0: #{tpu_custom_call.1}
  #allocation0 [shape = 'u32[]', space=smem, size = 0x4, offset = 0x4, fixed_abs, tag = 'smem constant byte address 0x4 - core index']
  #allocation1 [shape = 'u32[72,128]{1,0:T(1,128)}', space=vmem, size = 0x9000, scoped, tag = 'internal scratch']
  %s0 = inlined_call_operand.hbm [shape: f32[2,16,32], index: 0, kind: input, shape index: {}]
  %s1 = inlined_call_operand.hbm [shape: f32[2,16,16], index: 1, kind: input, shape index: {}]
  %s2 = inlined_call_operand.hbm [shape: f32[64,128], index: 2, kind: input, shape index: {}]
  %s3 = inlined_call_operand.vmem [shape: f32[1,128], index: 3, kind: input, shape index: {}]
  %s4 = inlined_call_operand.hbm [shape: f32[2,16,128], index: 4, kind: output, shape index: {}]
  %s5 = sld [smem:[#allocation0]]
  $region38: #{tpu_custom_call.1} parent=0
    _
  %s7 = ssub.s32 1, %s5
  %s8 = scalar_select 0, %s7, %s5
  $region1: #{tpu_custom_call.1} parent=0
    #allocation2 [shape = 'u8[16384]{0}', space=vmem, size = 0x4000, scoped, tag = 'input window, operand 0, single buffered']
    #allocation3 [shape = 's32[1]{0}', space=sflag, size = 0x4, scoped, tag = 'scoped memory for tpu_custom_call.1']
    #allocation4 [shape = 's32[1]{0}', space=sflag, size = 0x4, scoped, tag = 'scoped memory for tpu_custom_call.1']
    #allocation5 [shape = 'u8[16384]{0}', space=vmem, size = 0x4000, scoped, tag = 'input window, operand 1, single buffered']
    #allocation6 [shape = 's32[1]{0}', space=sflag, size = 0x4, scoped, tag = 'scoped memory for tpu_custom_call.1']
    #allocation7 [shape = 'u8[32768]{0}', space=vmem, size = 0x8000, scoped, tag = 'input window, operand 2, single buffered']
    #allocation8 [shape = 'u8[16384]{0}', space=vmem, size = 0x4000, scoped, tag = 'output window, operand 0, single buffered']
    %9 = vsyncpa [#allocation3], 0
    %10 = vsyncpa [#allocation6], 0
    %11 = vsyncpa [#allocation4], 0
    // Predicated region
    $region2: #{tpu_custom_call.1} parent=1 // pred_check
      _
    $region3: #{tpu_custom_call.1} parent=1 // pred_check_branch
      %13 = sbr.rel (0) target = $region5
    $region4: #{tpu_custom_call.1} parent=1 // pred_region
      %15 = vsyncadd [#allocation3], 0
      %s16 = sshll.u32 %s0, 4
      %s17 = int_to_ptr.hbm [resolvable:$true] %s16
      %s18 = sshll.u32 [#allocation2], 4
      %s19 = int_to_ptr.vmem [resolvable:$true] %s18
      %24 = dma.hbm_to_vmem [thread:$0]  %s17, 512, %s19, [#allocation3], 128, 128, 8
    $region5: #{tpu_custom_call.1} parent=1 // pred_fallthru
      _
    // Predicated region
    $region6: #{tpu_custom_call.1} parent=1 // pred_check
      _
    $region7: #{tpu_custom_call.1} parent=1 // pred_check_branch
      %26 = sbr.rel (0) target = $region9
    $region8: #{tpu_custom_call.1} parent=1 // pred_region
      %28 = vsyncadd [#allocation6], 0
      %s29 = sshll.u32 %s1, 4
      %s30 = int_to_ptr.hbm [resolvable:$true] %s29
      %s31 = sshll.u32 [#allocation5], 4
      %s32 = int_to_ptr.vmem [resolvable:$true] %s31
      %37 = dma.hbm_to_vmem [thread:$0]  %s30, 512, %s32, [#allocation6], 128, 128, 8
    $region9: #{tpu_custom_call.1} parent=1 // pred_fallthru
      _
    // Predicated region
    $region10: #{tpu_custom_call.1} parent=1 // pred_check
      _
    $region11: #{tpu_custom_call.1} parent=1 // pred_check_branch
      %39 = sbr.rel (0) target = $region13
    $region12: #{tpu_custom_call.1} parent=1 // pred_region
      %41 = vsyncadd [#allocation6], 0
      %s42 = sshll.u32 %s2, 4
      %s43 = int_to_ptr.hbm [resolvable:$true] %s42
      %s44 = sshll.u32 [#allocation7], 4
      %s45 = int_to_ptr.vmem [resolvable:$true] %s44
      %50 = dma.hbm_to_vmem [thread:$0]  %s43, 1024, %s45, [#allocation6], 128, 128, 8
    $region13: #{tpu_custom_call.1} parent=1 // pred_fallthru
      _
    // Predicated region
    $region14: #{tpu_custom_call.1} parent=1 // pred_check
      _
    $region15: #{tpu_custom_call.1} parent=1 // pred_check_branch
      %52 = sbr.rel (0) target = $region17
    $region16: #{tpu_custom_call.1} parent=1 // pred_region
      _
    $region17: #{tpu_custom_call.1} parent=1 // pred_fallthru
      _
    // Predicated region
    $region18: #{tpu_custom_call.1} parent=1 // pred_check
      _
    $region19: #{tpu_custom_call.1} parent=1 // pred_check_branch
      %54 = sbr.rel (0) target = $region21
    $region20: #{tpu_custom_call.1} parent=1 // pred_region
      %56 = dma.done [#allocation3], 512
    $region21: #{tpu_custom_call.1} parent=1 // pred_fallthru
      _
    // Predicated region
    $region22: #{tpu_custom_call.1} parent=1 // pred_check
      _
    $region23: #{tpu_custom_call.1} parent=1 // pred_check_branch
      %58 = sbr.rel (0) target = $region25
    $region24: #{tpu_custom_call.1} parent=1 // pred_region
      %60 = dma.done [#allocation6], 512
    $region25: #{tpu_custom_call.1} parent=1 // pred_fallthru
      _
    // Predicated region
    $region26: #{tpu_custom_call.1} parent=1 // pred_check
      _
    $region27: #{tpu_custom_call.1} parent=1 // pred_check_branch
      %62 = sbr.rel (0) target = $region29
    $region28: #{tpu_custom_call.1} parent=1 // pred_region
      %64 = dma.done [#allocation6], 1024
    $region29: #{tpu_custom_call.1} parent=1 // pred_fallthru
      _
    %v65 = vld [vmem:[#allocation2] sm:$0xff]
    %v66 = vld [vmem:[#allocation2 + $0x8] sm:$0xff]
    %v67 = vld [vmem:[#allocation2 + $0x10] sm:$0xff]
    %v68 = vld [vmem:[#allocation2 + $0x18] sm:$0xff]
    %v69 = vld [vmem:[#allocation5] sm:$0xff]
    %v70 = vld [vmem:[#allocation5 + $0x8] sm:$0xff]
    %v71 = vld [vmem:[#allocation5 + $0x10] sm:$0xff]
    %v72 = vld [vmem:[#allocation5 + $0x18] sm:$0xff]
    %vm73 = vcmask 130048
    %v75 = vsel %vm73, %v69, 0
    %v78 = vsel %vm73, %v70, 0
    %80 = vmatpush.msra.mxu0 0.0
    %81 = vmatpush.msra.mxu0 0.0
    %82 = vmatpush.msra.mxu0 0.0
    %83 = vmatpush.msra.mxu0 0.0
    %84 = vmatpush.msra.mxu0 0.0
    %85 = vmatpush.msra.mxu0 0.0
    %86 = vmatpush.msra.mxu0 0.0
    %87 = vmatpush.msra.mxu0 0.0
    %88 = vmatpush.msra.mxu0 0.0
    %89 = vmatpush.msra.mxu0 0.0
    %90 = vmatpush.msra.mxu0 0.0
    %91 = vmatpush.msra.mxu0 0.0
    %92 = vmatpush.msra.mxu0 0.0
    %93 = vmatpush.msra.mxu0 0.0
    %94 = vmatpush.msra.mxu0 %v66
    %95 = vmatpush.msra.mxu0 %v65
    %96 = vmatmul.f32.gmra.mxu0 %v75
    %v97 = vpop.f32.mrf.mxu0
    %v98 = vadd.f32 0.0, %v97
    %99 = vmatmul.f32.gmra.mxu0 %v78
    %v100 = vpop.f32.mrf.mxu0
    %v101 = vadd.f32 0.0, %v100
    %102 = vdwg.mxu0
    %v104 = vsel %vm73, %v71, 0
    %v107 = vsel %vm73, %v72, 0
    %109 = vmatpush.msra.mxu0 0.0
    %110 = vmatpush.msra.mxu0 0.0
    %111 = vmatpush.msra.mxu0 0.0
    %112 = vmatpush.msra.mxu0 0.0
    %113 = vmatpush.msra.mxu0 0.0
    %114 = vmatpush.msra.mxu0 0.0
    %115 = vmatpush.msra.mxu0 0.0
    %116 = vmatpush.msra.mxu0 0.0
    %117 = vmatpush.msra.mxu0 0.0
    %118 = vmatpush.msra.mxu0 0.0
    %119 = vmatpush.msra.mxu0 0.0
    %120 = vmatpush.msra.mxu0 0.0
    %121 = vmatpush.msra.mxu0 0.0
    %122 = vmatpush.msra.mxu0 0.0
    %123 = vmatpush.msra.mxu0 %v68
    %124 = vmatpush.msra.mxu0 %v67
    %125 = vmatmul.f32.gmra.mxu0 %v104
    %v126 = vpop.f32.mrf.mxu0
    %v127 = vadd.f32 0.0, %v126
    %128 = vmatmul.f32.gmra.mxu0 %v107
    %v129 = vpop.f32.mrf.mxu0
    %v130 = vadd.f32 0.0, %v129
    %131 = vdwg.mxu0
    %vm132 = vcmp.ne.f32.partialorder %v69, 0.0
    %vm133 = vcmp.ne.f32.partialorder %v70, 0.0
    %vm134 = vcmp.ne.f32.partialorder %v71, 0.0
    %vm135 = vcmp.ne.f32.partialorder %v72, 0.0
    %v136 = vsel %vm132, 1, 0
    %v137 = vsel %vm133, 1, 0
    %v138 = vsel %vm134, 1, 0
    %v139 = vsel %vm135, 1, 0
    %v140 = vcvt.s32.f32 %v136
    %v141 = vcvt.s32.f32 %v137
    %v142 = vcvt.s32.f32 %v138
    %v143 = vcvt.s32.f32 %v139
    %v144 = vsel %vm73, %v140, 0.0
    %v145 = vsel %vm73, %v141, 0.0
    %v146 = vadd.f32 %v144, %v145
    %v147 = vrot.slane %v146, 4
    %v148 = vadd.f32 %v146, %v147
    %v149 = vrot.slane %v148, 2
    %v150 = vadd.f32 %v148, %v149
    %v151 = vrot.slane %v150, 1
    %v152 = vadd.f32 %v150, %v151
    %v153 = vsel %vm73, %v142, 0.0
    %v154 = vsel %vm73, %v143, 0.0
    %v155 = vadd.f32 %v153, %v154
    %v156 = vrot.slane %v155, 4
    %v157 = vadd.f32 %v155, %v156
    %v158 = vrot.slane %v157, 2
    %v159 = vadd.f32 %v157, %v158
    %v160 = vrot.slane %v159, 1
    %v161 = vadd.f32 %v159, %v160
    %v162 = vadd.f32 %v152, 1.0
    %v163 = vadd.f32 %v161, 1.0
    %v164 = vrcp.pop %v162
    %v165 = vrcp.pop %v163
    %v166 = vlaneseq
    %v167 = vshrl.u32 %v166, 7
    %169 = vset.pattern.permute.xlu0 %v167
    %170 = vperm.xlu0 %169, %v164
    %v171 = vpop.permute.xlu0 %170
    %v172 = vlaneseq
    %v173 = vshrl.u32 %v172, 7
    %v174 = vadd.s32 %v173, 8
    %175 = vset.pattern.permute.xlu0 %v174
    %176 = vperm.xlu0 %175, %v164
    %v177 = vpop.permute.xlu0 %176
    %v178 = vlaneseq
    %v179 = vshrl.u32 %v178, 7
    %181 = vset.pattern.permute.xlu0 %v179
    %182 = vperm.xlu0 %181, %v165
    %v183 = vpop.permute.xlu0 %182
    %v184 = vlaneseq
    %v185 = vshrl.u32 %v184, 7
    %v186 = vadd.s32 %v185, 8
    %187 = vset.pattern.permute.xlu0 %v186
    %188 = vperm.xlu0 %187, %v165
    %v189 = vpop.permute.xlu0 %188
    %v190 = vmul.f32 %v98, %v171
    %v191 = vmul.f32 %v101, %v177
    %v192 = vmul.f32 %v127, %v183
    %v193 = vmul.f32 %v130, %v189
    %198 = vrot.lane.b32.xlu0 %v190, 32
    %v199 = vpop.permute.xlu0 %198
    %200 = vrot.lane.b32.xlu0 %v191, 32
    %v201 = vpop.permute.xlu0 %200
    %202 = vrot.lane.b32.xlu0 %v192, 32
    %v203 = vpop.permute.xlu0 %202
    %204 = vrot.lane.b32.xlu0 %v193, 32
    %v205 = vpop.permute.xlu0 %204
    %vm210 = vcmask 261120
    %v211 = vsel %vm210, %v65, %v199
    %v212 = vsel %vm210, %v66, %v201
    %v213 = vsel %vm210, %v67, %v203
    %v214 = vsel %vm210, %v68, %v205
    %v215 = vld [vmem:[#allocation7] sm:$0xff]
    %v216 = vld [vmem:[#allocation7 + $0x8] sm:$0xff]
    %v217 = vld [vmem:[#allocation7 + $0x10] sm:$0xff]
    %v218 = vld [vmem:[#allocation7 + $0x18] sm:$0xff]
    %v219 = vld [vmem:[#allocation7 + $0x20] sm:$0xff]
    %v220 = vld [vmem:[#allocation7 + $0x28] sm:$0xff]
    %v221 = vld [vmem:[#allocation7 + $0x30] sm:$0xff]
    %v222 = vld [vmem:[#allocation7 + $0x38] sm:$0xff]
    %v223 = vld [vmem:[%s3] sm:$0x1]
    %v225 = vperm.slane %v223, 0
    %vm227 = vcmask 523264
    %v229 = vsel %vm227, %v211, 0
    %v232 = vsel %vm227, %v212, 0
    %v235 = vsel %vm227, %v213, 0
    %v238 = vsel %vm227, %v214, 0
    %240 = vmatpush.msra.mxu0 0.0
    %241 = vmatpush.msra.mxu0 0.0
    %242 = vmatpush.msra.mxu0 0.0
    %243 = vmatpush.msra.mxu0 0.0
    %244 = vmatpush.msra.mxu0 0.0
    %245 = vmatpush.msra.mxu0 0.0
    %246 = vmatpush.msra.mxu0 0.0
    %247 = vmatpush.msra.mxu0 0.0
    %248 = vmatpush.msra.mxu0 %v222
    %249 = vmatpush.msra.mxu0 %v221
    %250 = vmatpush.msra.mxu0 %v220
    %251 = vmatpush.msra.mxu0 %v219
    %252 = vmatpush.msra.mxu0 %v218
    %253 = vmatpush.msra.mxu0 %v217
    %254 = vmatpush.msra.mxu0 %v216
    %255 = vmatpush.msra.mxu0 %v215
    %256 = vmatmul.f32.gmra.mxu0 %v229
    %v257 = vpop.f32.mrf.mxu0
    %v258 = vadd.f32 %v225, %v257
    %259 = vmatmul.f32.gmra.mxu0 %v232
    %v260 = vpop.f32.mrf.mxu0
    %v261 = vadd.f32 %v225, %v260
    %262 = vmatmul.f32.gmra.mxu0 %v235
    %v263 = vpop.f32.mrf.mxu0
    %v264 = vadd.f32 %v225, %v263
    %265 = vmatmul.f32.gmra.mxu0 %v238
    %v266 = vpop.f32.mrf.mxu0
    %v267 = vadd.f32 %v225, %v266
    %268 = vdwg.mxu0
    %v269 = vmax.f32 %v258, 0.0
    %v270 = vmax.f32 %v261, 0.0
    %v271 = vmax.f32 %v264, 0.0
    %v272 = vmax.f32 %v267, 0.0
    %273 = vst [vmem:[#allocation8] sm:$0xff] %v269
    %274 = vst [vmem:[#allocation8 + $0x8] sm:$0xff] %v270
    %275 = vst [vmem:[#allocation8 + $0x10] sm:$0xff] %v271
    %276 = vst [vmem:[#allocation8 + $0x18] sm:$0xff] %v272
    // Predicated region
    $region30: #{tpu_custom_call.1} parent=1 // pred_check
      _
    $region31: #{tpu_custom_call.1} parent=1 // pred_check_branch
      %278 = sbr.rel (0) target = $region33
    $region32: #{tpu_custom_call.1} parent=1 // pred_region
      %280 = vsyncadd [#allocation4], 0
      %s281 = sshll.u32 [#allocation8], 4
      %s282 = int_to_ptr.vmem [resolvable:$true] %s281
      %s283 = sshll.u32 %s4, 4
      %s284 = int_to_ptr.hbm [resolvable:$true] %s283
      %289 = dma.vmem_to_hbm [thread:$0]  %s282, 512, %s284, [#allocation4], 128, 128, 8
    $region33: #{tpu_custom_call.1} parent=1 // pred_fallthru
      _
    // Predicated region
    $region34: #{tpu_custom_call.1} parent=1 // pred_check
      _
    $region35: #{tpu_custom_call.1} parent=1 // pred_check_branch
      %291 = sbr.rel (0) target = $region37
    $region36: #{tpu_custom_call.1} parent=1 // pred_region
      %293 = dma.done [#allocation4], 512
    $region37: #{tpu_custom_call.1} parent=1 // pred_fallthru
      _
    %294 = vsyncpa [#allocation3], 1
    %295 = vsyncpa [#allocation6], 1
    %296 = vsyncpa [#allocation4], 1

</llo_original>
